<compile_context>
chip_gen: v7x
topology: tpu7x:2x2x1
jax: 0.10.0
libtpu: 0.0.40
codegen_flags: <defaults>
</compile_context>

<pallas_src>
import math

import jax
import jax.numpy as jnp
from jax.experimental import pallas as pl
from jax.experimental.pallas import tpu as pltpu


def _make_attn_kernel(Sq, Sk, D, Dv, BH):
    scale = 1.0 / math.sqrt(D)

    def kernel(q_ref, kbd_ref, vbd_ref, m_ref, o_ref):
        # q_ref  : (Sq, BH*D)      lane-dense Q (heads stacked along lanes)
        # kbd_ref: (BH*D, BH*Sk)   block-diagonal K^T (block h = K[h].T)
        # vbd_ref: (BH*Sk, BH*Dv)  block-diagonal V   (block h = V[h])
        # m_ref  : (Sq, BH*Sk)     additive mask, pre-packed per head
        # o_ref  : (Sq, BH*Dv)     lane-dense output slab (single unmasked store)
        q = q_ref[...] * scale  # fold 1/sqrt(D) into Q (Sq*BH*D elems)

        # One MXU matmul: every head's Q K^T lands lane-dense in (Sq, BH*Sk).
        s = jnp.dot(q, kbd_ref[...],
                    preferred_element_type=jnp.float32) + m_ref[...]

        # Segmented softmax over each head's Sk columns (matches torch.softmax).
        s3 = s.reshape(Sq, BH, Sk)
        mx = jnp.max(s3, axis=-1, keepdims=True)
        e3 = jnp.exp(s3 - mx)
        denom = jnp.sum(e3, axis=-1, keepdims=True)
        attn = (e3 * pl.reciprocal(denom, approx=True)).reshape(Sq, BH * Sk)

        # One MXU matmul: the result is already in o_ref's layout.
        o_ref[...] = jnp.dot(attn, vbd_ref[...],
                             preferred_element_type=jnp.float32
                             ).astype(o_ref.dtype)

    return kernel


@jax.jit
def sdpa_pallas(Q, K, V, mask):
    B, H, Sq, D = Q.shape
    _, _, Sk, Dv = V.shape
    BH = B * H

    # ---- wrapper-side layout plumbing (tiny arrays, fused by XLA under jit) ----
    # Q: (B,H,Sq,D) -> (Sq, BH*D): heads stacked along the lane axis.
    q_flat = Q.reshape(BH, Sq, D).transpose(1, 0, 2).reshape(Sq, BH * D)

    eye = jnp.eye(BH, dtype=Q.dtype)

    # K: block-diagonal (BH*D, BH*Sk), block h = K[h].T (D, Sk).
    kt = K.reshape(BH, Sk, D).transpose(0, 2, 1)                      # (BH, D, Sk)
    k_bd = (kt[:, :, None, :] * eye[:, None, :, None]).reshape(BH * D, BH * Sk)

    # V: block-diagonal (BH*Sk, BH*Dv), block h = V[h] (Sk, Dv).
    v3 = V.reshape(BH, Sk, Dv)                                        # (BH, Sk, Dv)
    v_bd = (v3[:, :, None, :] * eye[:, None, :, None]).reshape(BH * Sk, BH * Dv)

    # mask: (H,Sq,Sk) broadcast over batch, packed to (Sq, BH*Sk).
    m_flat = (jnp.broadcast_to(mask[None], (B, H, Sq, Sk))
              .reshape(BH, Sq, Sk).transpose(1, 0, 2).reshape(Sq, BH * Sk))

    out_flat = pl.pallas_call(
        _make_attn_kernel(Sq, Sk, D, Dv, BH),
        out_shape=jax.ShapeDtypeStruct((Sq, BH * Dv), Q.dtype),
        in_specs=[pl.BlockSpec(memory_space=pltpu.MemorySpace.VMEM)] * 4,
        out_specs=pl.BlockSpec(memory_space=pltpu.MemorySpace.VMEM),
    )(q_flat, k_bd, v_bd, m_flat)

    # (Sq, BH*Dv) -> (B, H, Sq, Dv): required output layout of the module.
    return out_flat.reshape(Sq, B, H, Dv).transpose(1, 2, 0, 3)


def sdpa_reference(Q, K, V, mask):
    qk = jnp.einsum("bhqd,bhkd->bhqk", Q, K) / math.sqrt(Q.shape[-1])
    qk = qk + mask[None]
    attn = jax.nn.softmax(qk, axis=-1)
    return jnp.einsum("bhqk,bhkv->bhqv", attn, V)


if __name__ == "__main__":
    B, H, Sq, Sk, D, Dv = 1, 8, 16, 32, 32, 16

    key = jax.random.PRNGKey(0)
    kq, kk, kv = jax.random.split(key, 3)
    Q = jax.random.normal(kq, (B, H, Sq, D), dtype=jnp.float32)
    K = jax.random.normal(kk, (B, H, Sk, D), dtype=jnp.float32)
    V = jax.random.normal(kv, (B, H, Sk, Dv), dtype=jnp.float32)
    # torch: randn(...).ge(0).float().fill_(-10000.0) -> all entries -10000.0
    mask = jnp.full((H, Sq, Sk), -10000.0, dtype=jnp.float32)

    out = sdpa_pallas(Q, K, V, mask)
    jax.block_until_ready(out)

    ref = sdpa_reference(Q, K, V, mask)
    assert out.shape == (B, H, Sq, Dv)
    # approx reciprocal (EUP) slightly loosens tolerance vs exact divide
    assert jnp.allclose(out, ref, atol=5e-3, rtol=5e-3), float(
        jnp.max(jnp.abs(out - ref))
    )

    print("KERNEL_OK")
</pallas_src>

<mosaic_0001>
module attributes {stable_mosaic.version = 11 : i64} {
  func.func @kernel(%arg0: memref<16x256xf32, #tpu.memory_space<vmem>>, %arg1: memref<256x256xf32, #tpu.memory_space<vmem>>, %arg2: memref<256x128xf32, #tpu.memory_space<vmem>>, %arg3: memref<16x256xf32, #tpu.memory_space<vmem>>, %arg4: memref<16x128xf32, #tpu.memory_space<vmem>>) attributes {dimension_semantics = [], scalar_prefetch = 0 : i64, scratch_operands = 0 : i64, tpu.core_type = #tpu.core_type<tc>} {
    %c0 = arith.constant 0 : index
    %c0_0 = arith.constant 0 : index
    %0 = vector.load %arg0[%c0, %c0_0] : memref<16x256xf32, #tpu.memory_space<vmem>>, vector<16x256xf32>
    %cst = arith.constant 0.176776692 : f32
    %1 = vector.broadcast %cst : f32 to vector<16x256xf32>
    %2 = arith.mulf %0, %1 : vector<16x256xf32>
    %c0_1 = arith.constant 0 : index
    %c0_2 = arith.constant 0 : index
    %3 = vector.load %arg1[%c0_1, %c0_2] : memref<256x256xf32, #tpu.memory_space<vmem>>, vector<256x256xf32>
    %cst_3 = arith.constant dense<0.000000e+00> : vector<16x256xf32>
    %4 = tpu.matmul %2, %3, %cst_3 {dimension_numbers = #tpu.dot_dimension_numbers<[1], [0], [0], [1], [0, 0, 1, 1], [], []>} : vector<16x256xf32>, vector<256x256xf32>, vector<16x256xf32> -> vector<16x256xf32>
    %c0_4 = arith.constant 0 : index
    %c0_5 = arith.constant 0 : index
    %5 = vector.load %arg3[%c0_4, %c0_5] : memref<16x256xf32, #tpu.memory_space<vmem>>, vector<16x256xf32>
    %6 = arith.addf %4, %5 : vector<16x256xf32>
    %7 = vector.shape_cast %6 : vector<16x256xf32> to vector<16x8x32xf32>
    %cst_6 = arith.constant dense<0xFF800000> : vector<16x8xf32>
    %8 = vector.multi_reduction <maximumf>, %7, %cst_6 [2] : vector<16x8x32xf32> to vector<16x8xf32>
    %9 = vector.shape_cast %8 : vector<16x8xf32> to vector<16x8x1xf32>
    %10 = vector.broadcast %9 : vector<16x8x1xf32> to vector<16x8x32xf32>
    %11 = arith.subf %7, %10 : vector<16x8x32xf32>
    %12 = math.exp %11 : vector<16x8x32xf32>
    %cst_7 = arith.constant dense<0.000000e+00> : vector<16x8xf32>
    %13 = vector.multi_reduction <add>, %12, %cst_7 [2] : vector<16x8x32xf32> to vector<16x8xf32>
    %14 = vector.shape_cast %13 : vector<16x8xf32> to vector<16x8x1xf32>
    %15 = tpu.reciprocal %14 {approx = true} : vector<16x8x1xf32> -> vector<16x8x1xf32>
    %16 = vector.broadcast %15 : vector<16x8x1xf32> to vector<16x8x32xf32>
    %17 = arith.mulf %12, %16 : vector<16x8x32xf32>
    %18 = vector.shape_cast %17 : vector<16x8x32xf32> to vector<16x256xf32>
    %c0_8 = arith.constant 0 : index
    %c0_9 = arith.constant 0 : index
    %19 = vector.load %arg2[%c0_8, %c0_9] : memref<256x128xf32, #tpu.memory_space<vmem>>, vector<256x128xf32>
    %cst_10 = arith.constant dense<0.000000e+00> : vector<16x128xf32>
    %20 = tpu.matmul %18, %19, %cst_10 {dimension_numbers = #tpu.dot_dimension_numbers<[1], [0], [0], [1], [0, 0, 1, 1], [], []>} : vector<16x256xf32>, vector<256x128xf32>, vector<16x128xf32> -> vector<16x128xf32>
    %c0_11 = arith.constant 0 : index
    %c0_12 = arith.constant 0 : index
    %21 = vector.load %arg4[%c0_11, %c0_12] : memref<16x128xf32, #tpu.memory_space<vmem>>, vector<16x128xf32>
    tpu.vector_store %arg4[%c0_11, %c0_12], %20 {strides = array<i32>} : memref<16x128xf32, #tpu.memory_space<vmem>>, vector<16x128xf32>,
    return
  }
}

</mosaic_0001>

<llo_original>
// kernel: sdpa_pallas.1
$region0: #{sdpa_pallas.1}
  #allocation0 [shape = 'u32[]', space=smem, size = 0x4, offset = 0x4, fixed_abs, tag = 'smem constant byte address 0x4 - core index']
  #allocation1 [shape = 'u32[144,128]{1,0:T(1,128)}', space=vmem, size = 0x12000, scoped, tag = 'internal scratch']
  %s0 = inlined_call_operand.vmem [shape: f32[16,256], index: 0, kind: input, shape index: {}]
  %s1 = inlined_call_operand.vmem [shape: f32[256,256], index: 1, kind: input, shape index: {}]
  %s2 = inlined_call_operand.vmem [shape: f32[256,128], index: 2, kind: input, shape index: {}]
  %s3 = inlined_call_operand.vmem [shape: f32[16,256], index: 3, kind: input, shape index: {}]
  %s4 = inlined_call_operand.vmem [shape: f32[16,128], index: 4, kind: output, shape index: {}]
  %s5 = sld [smem:[#allocation0]]
  $region26: #{sdpa_pallas.1} parent=0
    _
  %s7 = ssub.s32 1, %s5
  %s8 = scalar_select 0, %s7, %s5
  // Predicated region
  $region2: #{sdpa_pallas.1} parent=0 // pred_check
    _
  $region3: #{sdpa_pallas.1} parent=0 // pred_check_branch
    %10 = sbr.rel (0) target = $region5
  $region4: #{sdpa_pallas.1} parent=0 // pred_region
    _
  $region5: #{sdpa_pallas.1} parent=0 // pred_fallthru
    _
  // Predicated region
  $region6: #{sdpa_pallas.1} parent=0 // pred_check
    _
  $region7: #{sdpa_pallas.1} parent=0 // pred_check_branch
    %12 = sbr.rel (0) target = $region9
  $region8: #{sdpa_pallas.1} parent=0 // pred_region
    _
  $region9: #{sdpa_pallas.1} parent=0 // pred_fallthru
    _
  // Predicated region
  $region10: #{sdpa_pallas.1} parent=0 // pred_check
    _
  $region11: #{sdpa_pallas.1} parent=0 // pred_check_branch
    %14 = sbr.rel (0) target = $region13
  $region12: #{sdpa_pallas.1} parent=0 // pred_region
    _
  $region13: #{sdpa_pallas.1} parent=0 // pred_fallthru
    _
  // Predicated region
  $region14: #{sdpa_pallas.1} parent=0 // pred_check
    _
  $region15: #{sdpa_pallas.1} parent=0 // pred_check_branch
    %16 = sbr.rel (0) target = $region17
  $region16: #{sdpa_pallas.1} parent=0 // pred_region
    _
  $region17: #{sdpa_pallas.1} parent=0 // pred_fallthru
    _
  %v17 = vld [vmem:[%s0] sm:$0xff]
  %v18 = vld [vmem:[%s0 + $0x8] sm:$0xff]
  %v19 = vld [vmem:[%s0 + $0x10] sm:$0xff]
  %v20 = vld [vmem:[%s0 + $0x18] sm:$0xff]
  %v21 = vmul.f32 %v17, 0.17677669
  %v22 = vmul.f32 %v18, 0.17677669
  %v23 = vmul.f32 %v19, 0.17677669
  %v24 = vmul.f32 %v20, 0.17677669
  %v25 = vld [vmem:[%s1] sm:$0xff]
  %v26 = vld [vmem:[%s1 + $0x8] sm:$0xff]
  %v27 = vld [vmem:[%s1 + $0x10] sm:$0xff]
  %v28 = vld [vmem:[%s1 + $0x18] sm:$0xff]
  %v29 = vld [vmem:[%s1 + $0x20] sm:$0xff]
  %v30 = vld [vmem:[%s1 + $0x28] sm:$0xff]
  %v31 = vld [vmem:[%s1 + $0x30] sm:$0xff]
  %v32 = vld [vmem:[%s1 + $0x38] sm:$0xff]
  %v33 = vld [vmem:[%s1 + $0x40] sm:$0xff]
  %v34 = vld [vmem:[%s1 + $0x48] sm:$0xff]
  %v35 = vld [vmem:[%s1 + $0x50] sm:$0xff]
  %v36 = vld [vmem:[%s1 + $0x58] sm:$0xff]
  %v37 = vld [vmem:[%s1 + $0x60] sm:$0xff]
  %v38 = vld [vmem:[%s1 + $0x68] sm:$0xff]
  %v39 = vld [vmem:[%s1 + $0x70] sm:$0xff]
  %v40 = vld [vmem:[%s1 + $0x78] sm:$0xff]
  %v41 = vld [vmem:[%s1 + $0x80] sm:$0xff]
  %v42 = vld [vmem:[%s1 + $0x88] sm:$0xff]
  %v43 = vld [vmem:[%s1 + $0x90] sm:$0xff]
  %v44 = vld [vmem:[%s1 + $0x98] sm:$0xff]
  %v45 = vld [vmem:[%s1 + $0xa0] sm:$0xff]
  %v46 = vld [vmem:[%s1 + $0xa8] sm:$0xff]
  %v47 = vld [vmem:[%s1 + $0xb0] sm:$0xff]
  %v48 = vld [vmem:[%s1 + $0xb8] sm:$0xff]
  %v49 = vld [vmem:[%s1 + $0xc0] sm:$0xff]
  %v50 = vld [vmem:[%s1 + $0xc8] sm:$0xff]
  %v51 = vld [vmem:[%s1 + $0xd0] sm:$0xff]
  %v52 = vld [vmem:[%s1 + $0xd8] sm:$0xff]
  %v53 = vld [vmem:[%s1 + $0xe0] sm:$0xff]
  %v54 = vld [vmem:[%s1 + $0xe8] sm:$0xff]
  %v55 = vld [vmem:[%s1 + $0xf0] sm:$0xff]
  %v56 = vld [vmem:[%s1 + $0xf8] sm:$0xff]
  %v57 = vld [vmem:[%s1 + $0x100] sm:$0xff]
  %v58 = vld [vmem:[%s1 + $0x108] sm:$0xff]
  %v59 = vld [vmem:[%s1 + $0x110] sm:$0xff]
  %v60 = vld [vmem:[%s1 + $0x118] sm:$0xff]
  %v61 = vld [vmem:[%s1 + $0x120] sm:$0xff]
  %v62 = vld [vmem:[%s1 + $0x128] sm:$0xff]
  %v63 = vld [vmem:[%s1 + $0x130] sm:$0xff]
  %v64 = vld [vmem:[%s1 + $0x138] sm:$0xff]
  %v65 = vld [vmem:[%s1 + $0x140] sm:$0xff]
  %v66 = vld [vmem:[%s1 + $0x148] sm:$0xff]
  %v67 = vld [vmem:[%s1 + $0x150] sm:$0xff]
  %v68 = vld [vmem:[%s1 + $0x158] sm:$0xff]
  %v69 = vld [vmem:[%s1 + $0x160] sm:$0xff]
  %v70 = vld [vmem:[%s1 + $0x168] sm:$0xff]
  %v71 = vld [vmem:[%s1 + $0x170] sm:$0xff]
  %v72 = vld [vmem:[%s1 + $0x178] sm:$0xff]
  %v73 = vld [vmem:[%s1 + $0x180] sm:$0xff]
  %v74 = vld [vmem:[%s1 + $0x188] sm:$0xff]
  %v75 = vld [vmem:[%s1 + $0x190] sm:$0xff]
  %v76 = vld [vmem:[%s1 + $0x198] sm:$0xff]
  %v77 = vld [vmem:[%s1 + $0x1a0] sm:$0xff]
  %v78 = vld [vmem:[%s1 + $0x1a8] sm:$0xff]
  %v79 = vld [vmem:[%s1 + $0x1b0] sm:$0xff]
  %v80 = vld [vmem:[%s1 + $0x1b8] sm:$0xff]
  %v81 = vld [vmem:[%s1 + $0x1c0] sm:$0xff]
  %v82 = vld [vmem:[%s1 + $0x1c8] sm:$0xff]
  %v83 = vld [vmem:[%s1 + $0x1d0] sm:$0xff]
  %v84 = vld [vmem:[%s1 + $0x1d8] sm:$0xff]
  %v85 = vld [vmem:[%s1 + $0x1e0] sm:$0xff]
  %v86 = vld [vmem:[%s1 + $0x1e8] sm:$0xff]
  %v87 = vld [vmem:[%s1 + $0x1f0] sm:$0xff]
  %v88 = vld [vmem:[%s1 + $0x1f8] sm:$0xff]
  %v89 = vld [vmem:[%s3] sm:$0xff]
  %v90 = vld [vmem:[%s3 + $0x8] sm:$0xff]
  %v91 = vld [vmem:[%s3 + $0x10] sm:$0xff]
  %v92 = vld [vmem:[%s3 + $0x18] sm:$0xff]
  %93 = vmatprep.subr.mxu0 %v26
  %94 = vmatpush1.msra.mxu0 %v25
  %95 = vmatprep.subr.mxu0 %v28
  %96 = vmatpush1.msra.mxu0 %v27
  %97 = vmatprep.subr.mxu0 %v30
  %98 = vmatpush1.msra.mxu0 %v29
  %99 = vmatprep.subr.mxu0 %v32
  %100 = vmatpush1.msra.mxu0 %v31
  %101 = vmatprep.subr.mxu0 %v34
  %102 = vmatpush1.msra.mxu0 %v33
  %103 = vmatprep.subr.mxu0 %v36
  %104 = vmatpush1.msra.mxu0 %v35
  %105 = vmatprep.subr.mxu0 %v38
  %106 = vmatpush1.msra.mxu0 %v37
  %107 = vmatprep.subr.mxu0 %v40
  %108 = vmatpush1.msra.mxu0 %v39
  %109 = vmatprep.subr.mxu0 %v42
  %110 = vmatpush1.msra.mxu0 %v41
  %111 = vmatprep.subr.mxu0 %v44
  %112 = vmatpush1.msra.mxu0 %v43
  %113 = vmatprep.subr.mxu0 %v46
  %114 = vmatpush1.msra.mxu0 %v45
  %115 = vmatprep.subr.mxu0 %v48
  %116 = vmatpush1.msra.mxu0 %v47
  %117 = vmatprep.subr.mxu0 %v50
  %118 = vmatpush1.msra.mxu0 %v49
  %119 = vmatprep.subr.mxu0 %v52
  %120 = vmatpush1.msra.mxu0 %v51
  %121 = vmatprep.subr.mxu0 %v54
  %122 = vmatpush1.msra.mxu0 %v53
  %123 = vmatprep.subr.mxu0 %v56
  %124 = vmatpush1.msra.mxu0 %v55
  %125 = vmatprep.subr.mxu0 %v58
  %126 = vmatpush1.msra.mxu0 %v57
  %127 = vmatprep.subr.mxu0 %v60
  %128 = vmatpush1.msra.mxu0 %v59
  %129 = vmatprep.subr.mxu0 %v62
  %130 = vmatpush1.msra.mxu0 %v61
  %131 = vmatprep.subr.mxu0 %v64
  %132 = vmatpush1.msra.mxu0 %v63
  %133 = vmatprep.subr.mxu0 %v66
  %134 = vmatpush1.msra.mxu0 %v65
  %135 = vmatprep.subr.mxu0 %v68
  %136 = vmatpush1.msra.mxu0 %v67
  %137 = vmatprep.subr.mxu0 %v70
  %138 = vmatpush1.msra.mxu0 %v69
  %139 = vmatprep.subr.mxu0 %v72
  %140 = vmatpush1.msra.mxu0 %v71
  %141 = vmatprep.subr.mxu0 %v74
  %142 = vmatpush1.msra.mxu0 %v73
  %143 = vmatprep.subr.mxu0 %v76
  %144 = vmatpush1.msra.mxu0 %v75
  %145 = vmatprep.subr.mxu0 %v78
  %146 = vmatpush1.msra.mxu0 %v77
  %147 = vmatprep.subr.mxu0 %v80
  %148 = vmatpush1.msra.mxu0 %v79
  %149 = vmatprep.subr.mxu0 %v82
  %150 = vmatpush1.msra.mxu0 %v81
  %151 = vmatprep.subr.mxu0 %v84
  %152 = vmatpush1.msra.mxu0 %v83
  %153 = vmatprep.subr.mxu0 %v86
  %154 = vmatpush1.msra.mxu0 %v85
  %155 = vmatprep.subr.mxu0 %v88
  %156 = vmatpush1.msra.mxu0 %v87
  %157 = vmatprep.mubr.f32.mxu0 %v22
  %158 = vmatmul.mubr.f32.gmra.mrb[0].mxu0 %v21
  %v159 = vpop.f32.mrb[0].mxu0
  %v160 = vadd.f32 %v89, %v159
  %v161 = vpop.f32.mrb[0].mxu0
  %v162 = vadd.f32 %v90, %v161
  %163 = vmatprep.mubr.f32.mxu0 %v24
  %164 = vmatmul.mubr.f32.gmra.mrb[0].mxu0 %v23
  %v165 = vpop.f32.mrb[0].mxu0
  %v166 = vadd.f32 %v91, %v165
  %v167 = vpop.f32.mrb[0].mxu0
  %v168 = vadd.f32 %v92, %v167
  %169 = vdwg.mxu0
  %172 = vrot.lane.b32.xlu0 %v160, 96
  %v173 = vpop.permute.xlu0 %172
  %174 = vrot.lane.b32.xlu0 %v166, 96
  %v175 = vpop.permute.xlu0 %174
  %178 = vrot.lane.b32.xlu0 %v160, 64
  %v179 = vpop.permute.xlu0 %178
  %180 = vrot.lane.b32.xlu0 %v166, 64
  %v181 = vpop.permute.xlu0 %180
  %184 = vrot.lane.b32.xlu0 %v160, 32
  %v185 = vpop.permute.xlu0 %184
  %186 = vrot.lane.b32.xlu0 %v166, 32
  %v187 = vpop.permute.xlu0 %186
  %192 = vrot.lane.b32.xlu0 %v162, 96
  %v193 = vpop.permute.xlu0 %192
  %194 = vrot.lane.b32.xlu0 %v168, 96
  %v195 = vpop.permute.xlu0 %194
  %198 = vrot.lane.b32.xlu0 %v162, 64
  %v199 = vpop.permute.xlu0 %198
  %200 = vrot.lane.b32.xlu0 %v168, 64
  %v201 = vpop.permute.xlu0 %200
  %204 = vrot.lane.b32.xlu0 %v162, 32
  %v205 = vpop.permute.xlu0 %204
  %206 = vrot.lane.b32.xlu0 %v168, 32
  %v207 = vpop.permute.xlu0 %206
  %v210 = vcombine.low %v160, %v179
  %v211 = vcombine.high %v160, %v179
  %v213 = vunpack.c.l.s4 1983009808
  %v214 = vunpack.c.0.s8 %v213
  %v215 = vlaneseq
  %v216 = vshrl.u32 %v215, 7
  %v217 = vsub.s32 %v214, %v216
  %v218 = vrot.slane %v210, %v217
  %v220 = vunpack.c.l.s4 1983009808
  %v221 = vunpack.c.0.s8 %v220
  %v222 = vlaneseq
  %v223 = vshrl.u32 %v222, 7
  %v224 = vsub.s32 %v221, %v223
  %v225 = vrot.slane %v211, %v224
  %v226 = vcombine.low %v173, %v185
  %v227 = vcombine.high %v173, %v185
  %v229 = vunpack.c.l.s4 1983009808
  %v230 = vunpack.c.0.s8 %v229
  %v231 = vlaneseq
  %v232 = vshrl.u32 %v231, 7
  %v233 = vsub.s32 %v230, %v232
  %v234 = vrot.slane %v226, %v233
  %v236 = vunpack.c.l.s4 1983009808
  %v237 = vunpack.c.0.s8 %v236
  %v238 = vlaneseq
  %v239 = vshrl.u32 %v238, 7
  %v240 = vsub.s32 %v237, %v239
  %v241 = vrot.slane %v227, %v240
  %v242 = vcombine.low %v162, %v199
  %v243 = vcombine.high %v162, %v199
  %v245 = vunpack.c.l.s4 1983009808
  %v246 = vunpack.c.0.s8 %v245
  %v247 = vlaneseq
  %v248 = vshrl.u32 %v247, 7
  %v249 = vsub.s32 %v246, %v248
  %v250 = vrot.slane %v242, %v249
  %v252 = vunpack.c.l.s4 1983009808
  %v253 = vunpack.c.0.s8 %v252
  %v254 = vlaneseq
  %v255 = vshrl.u32 %v254, 7
  %v256 = vsub.s32 %v253, %v255
  %v257 = vrot.slane %v243, %v256
  %v258 = vcombine.low %v193, %v205
  %v259 = vcombine.high %v193, %v205
  %v261 = vunpack.c.l.s4 1983009808
  %v262 = vunpack.c.0.s8 %v261
  %v263 = vlaneseq
  %v264 = vshrl.u32 %v263, 7
  %v265 = vsub.s32 %v262, %v264
  %v266 = vrot.slane %v258, %v265
  %v268 = vunpack.c.l.s4 1983009808
  %v269 = vunpack.c.0.s8 %v268
  %v270 = vlaneseq
  %v271 = vshrl.u32 %v270, 7
  %v272 = vsub.s32 %v269, %v271
  %v273 = vrot.slane %v259, %v272
  %v274 = vcombine.low %v218, %v234
  %v275 = vcombine.high %v218, %v234
  %v277 = vunpack.c.l.s4 1934713408
  %v278 = vunpack.c.0.s8 %v277
  %v279 = vlaneseq
  %v280 = vshrl.u32 %v279, 7
  %v281 = vsub.s32 %v278, %v280
  %v282 = vrot.slane %v274, %v281
  %v284 = vunpack.c.l.s4 1934713408
  %v285 = vunpack.c.0.s8 %v284
  %v286 = vlaneseq
  %v287 = vshrl.u32 %v286, 7
  %v288 = vsub.s32 %v285, %v287
  %v289 = vrot.slane %v275, %v288
  %v290 = vcombine.low %v225, %v241
  %v291 = vcombine.high %v225, %v241
  %v293 = vunpack.c.l.s4 1934713408
  %v294 = vunpack.c.0.s8 %v293
  %v295 = vlaneseq
  %v296 = vshrl.u32 %v295, 7
  %v297 = vsub.s32 %v294, %v296
  %v298 = vrot.slane %v290, %v297
  %v300 = vunpack.c.l.s4 1934713408
  %v301 = vunpack.c.0.s8 %v300
  %v302 = vlaneseq
  %v303 = vshrl.u32 %v302, 7
  %v304 = vsub.s32 %v301, %v303
  %v305 = vrot.slane %v291, %v304
  %v306 = vcombine.low %v250, %v266
  %v307 = vcombine.high %v250, %v266
  %v309 = vunpack.c.l.s4 1934713408
  %v310 = vunpack.c.0.s8 %v309
  %v311 = vlaneseq
  %v312 = vshrl.u32 %v311, 7
  %v313 = vsub.s32 %v310, %v312
  %v314 = vrot.slane %v306, %v313
  %v316 = vunpack.c.l.s4 1934713408
  %v317 = vunpack.c.0.s8 %v316
  %v318 = vlaneseq
  %v319 = vshrl.u32 %v318, 7
  %v320 = vsub.s32 %v317, %v319
  %v321 = vrot.slane %v307, %v320
  %v322 = vcombine.low %v257, %v273
  %v323 = vcombine.high %v257, %v273
  %v325 = vunpack.c.l.s4 1934713408
  %v326 = vunpack.c.0.s8 %v325
  %v327 = vlaneseq
  %v328 = vshrl.u32 %v327, 7
  %v329 = vsub.s32 %v326, %v328
  %v330 = vrot.slane %v322, %v329
  %v332 = vunpack.c.l.s4 1934713408
  %v333 = vunpack.c.0.s8 %v332
  %v334 = vlaneseq
  %v335 = vshrl.u32 %v334, 7
  %v336 = vsub.s32 %v333, %v335
  %v337 = vrot.slane %v323, %v336
  %v338 = vcombine.low %v282, %v314
  %v339 = vcombine.high %v282, %v314
  %v340 = vcombine.low %v289, %v321
  %v341 = vcombine.high %v289, %v321
  %v342 = vcombine.low %v298, %v330
  %v343 = vcombine.high %v298, %v330
  %v344 = vcombine.low %v305, %v337
  %v345 = vcombine.high %v305, %v337
  %v346 = vcombine.low %v166, %v181
  %v347 = vcombine.high %v166, %v181
  %v349 = vunpack.c.l.s4 1983009808
  %v350 = vunpack.c.0.s8 %v349
  %v351 = vlaneseq
  %v352 = vshrl.u32 %v351, 7
  %v353 = vsub.s32 %v350, %v352
  %v354 = vrot.slane %v346, %v353
  %v356 = vunpack.c.l.s4 1983009808
  %v357 = vunpack.c.0.s8 %v356
  %v358 = vlaneseq
  %v359 = vshrl.u32 %v358, 7
  %v360 = vsub.s32 %v357, %v359
  %v361 = vrot.slane %v347, %v360
  %v362 = vcombine.low %v175, %v187
  %v363 = vcombine.high %v175, %v187
  %v365 = vunpack.c.l.s4 1983009808
  %v366 = vunpack.c.0.s8 %v365
  %v367 = vlaneseq
  %v368 = vshrl.u32 %v367, 7
  %v369 = vsub.s32 %v366, %v368
  %v370 = vrot.slane %v362, %v369
  %v372 = vunpack.c.l.s4 1983009808
  %v373 = vunpack.c.0.s8 %v372
  %v374 = vlaneseq
  %v375 = vshrl.u32 %v374, 7
  %v376 = vsub.s32 %v373, %v375
  %v377 = vrot.slane %v363, %v376
  %v378 = vcombine.low %v168, %v201
  %v379 = vcombine.high %v168, %v201
  %v381 = vunpack.c.l.s4 1983009808
  %v382 = vunpack.c.0.s8 %v381
  %v383 = vlaneseq
  %v384 = vshrl.u32 %v383, 7
  %v385 = vsub.s32 %v382, %v384
  %v386 = vrot.slane %v378, %v385
  %v388 = vunpack.c.l.s4 1983009808
  %v389 = vunpack.c.0.s8 %v388
  %v390 = vlaneseq
  %v391 = vshrl.u32 %v390, 7
  %v392 = vsub.s32 %v389, %v391
  %v393 = vrot.slane %v379, %v392
  %v394 = vcombine.low %v195, %v207
  %v395 = vcombine.high %v195, %v207
  %v397 = vunpack.c.l.s4 1983009808
  %v398 = vunpack.c.0.s8 %v397
  %v399 = vlaneseq
  %v400 = vshrl.u32 %v399, 7
  %v401 = vsub.s32 %v398, %v400
  %v402 = vrot.slane %v394, %v401
  %v404 = vunpack.c.l.s4 1983009808
  %v405 = vunpack.c.0.s8 %v404
  %v406 = vlaneseq
  %v407 = vshrl.u32 %v406, 7
  %v408 = vsub.s32 %v405, %v407
  %v409 = vrot.slane %v395, %v408
  %v410 = vcombine.low %v354, %v370
  %v411 = vcombine.high %v354, %v370
  %v413 = vunpack.c.l.s4 1934713408
  %v414 = vunpack.c.0.s8 %v413
  %v415 = vlaneseq
  %v416 = vshrl.u32 %v415, 7
  %v417 = vsub.s32 %v414, %v416
  %v418 = vrot.slane %v410, %v417
  %v420 = vunpack.c.l.s4 1934713408
  %v421 = vunpack.c.0.s8 %v420
  %v422 = vlaneseq
  %v423 = vshrl.u32 %v422, 7
  %v424 = vsub.s32 %v421, %v423
  %v425 = vrot.slane %v411, %v424
  %v426 = vcombine.low %v361, %v377
  %v427 = vcombine.high %v361, %v377
  %v429 = vunpack.c.l.s4 1934713408
  %v430 = vunpack.c.0.s8 %v429
  %v431 = vlaneseq
  %v432 = vshrl.u32 %v431, 7
  %v433 = vsub.s32 %v430, %v432
  %v434 = vrot.slane %v426, %v433
  %v436 = vunpack.c.l.s4 1934713408
  %v437 = vunpack.c.0.s8 %v436
  %v438 = vlaneseq
  %v439 = vshrl.u32 %v438, 7
  %v440 = vsub.s32 %v437, %v439
  %v441 = vrot.slane %v427, %v440
  %v442 = vcombine.low %v386, %v402
  %v443 = vcombine.high %v386, %v402
  %v445 = vunpack.c.l.s4 1934713408
  %v446 = vunpack.c.0.s8 %v445
  %v447 = vlaneseq
  %v448 = vshrl.u32 %v447, 7
  %v449 = vsub.s32 %v446, %v448
  %v450 = vrot.slane %v442, %v449
  %v452 = vunpack.c.l.s4 1934713408
  %v453 = vunpack.c.0.s8 %v452
  %v454 = vlaneseq
  %v455 = vshrl.u32 %v454, 7
  %v456 = vsub.s32 %v453, %v455
  %v457 = vrot.slane %v443, %v456
  %v458 = vcombine.low %v393, %v409
  %v459 = vcombine.high %v393, %v409
  %v461 = vunpack.c.l.s4 1934713408
  %v462 = vunpack.c.0.s8 %v461
  %v463 = vlaneseq
  %v464 = vshrl.u32 %v463, 7
  %v465 = vsub.s32 %v462, %v464
  %v466 = vrot.slane %v458, %v465
  %v468 = vunpack.c.l.s4 1934713408
  %v469 = vunpack.c.0.s8 %v468
  %v470 = vlaneseq
  %v471 = vshrl.u32 %v470, 7
  %v472 = vsub.s32 %v469, %v471
  %v473 = vrot.slane %v459, %v472
  %v474 = vcombine.low %v418, %v450
  %v475 = vcombine.high %v418, %v450
  %v476 = vcombine.low %v425, %v457
  %v477 = vcombine.high %v425, %v457
  %v478 = vcombine.low %v434, %v466
  %v479 = vcombine.high %v434, %v466
  %v480 = vcombine.low %v441, %v473
  %v481 = vcombine.high %v441, %v473
  %vm482 = vcmask 261120
  %v483 = vsel %vm482, %v338, -inf
  %484 = vmax.xlane.f32.xlu0 %v483
  %v485 = vpop.xlane.xlu0 %484
  %v486 = vsel %vm482, %v339, -inf
  %487 = vmax.xlane.f32.xlu0 %v486
  %v488 = vpop.xlane.xlu0 %487
  %v489 = vsel %vm482, %v340, -inf
  %490 = vmax.xlane.f32.xlu0 %v489
  %v491 = vpop.xlane.xlu0 %490
  %v492 = vsel %vm482, %v341, -inf
  %493 = vmax.xlane.f32.xlu0 %v492
  %v494 = vpop.xlane.xlu0 %493
  %v495 = vsel %vm482, %v342, -inf
  %496 = vmax.xlane.f32.xlu0 %v495
  %v497 = vpop.xlane.xlu0 %496
  %v498 = vsel %vm482, %v343, -inf
  %499 = vmax.xlane.f32.xlu0 %v498
  %v500 = vpop.xlane.xlu0 %499
  %v501 = vsel %vm482, %v344, -inf
  %502 = vmax.xlane.f32.xlu0 %v501
  %v503 = vpop.xlane.xlu0 %502
  %v504 = vsel %vm482, %v345, -inf
  %505 = vmax.xlane.f32.xlu0 %v504
  %v506 = vpop.xlane.xlu0 %505
  %v507 = vsel %vm482, %v474, -inf
  %508 = vmax.xlane.f32.xlu0 %v507
  %v509 = vpop.xlane.xlu0 %508
  %v510 = vsel %vm482, %v475, -inf
  %511 = vmax.xlane.f32.xlu0 %v510
  %v512 = vpop.xlane.xlu0 %511
  %v513 = vsel %vm482, %v476, -inf
  %514 = vmax.xlane.f32.xlu0 %v513
  %v515 = vpop.xlane.xlu0 %514
  %v516 = vsel %vm482, %v477, -inf
  %517 = vmax.xlane.f32.xlu0 %v516
  %v518 = vpop.xlane.xlu0 %517
  %v519 = vsel %vm482, %v478, -inf
  %520 = vmax.xlane.f32.xlu0 %v519
  %v521 = vpop.xlane.xlu0 %520
  %v522 = vsel %vm482, %v479, -inf
  %523 = vmax.xlane.f32.xlu0 %v522
  %v524 = vpop.xlane.xlu0 %523
  %v525 = vsel %vm482, %v480, -inf
  %526 = vmax.xlane.f32.xlu0 %v525
  %v527 = vpop.xlane.xlu0 %526
  %v528 = vsel %vm482, %v481, -inf
  %529 = vmax.xlane.f32.xlu0 %v528
  %v530 = vpop.xlane.xlu0 %529
  %v531 = vsub.f32 %v338, %v485
  %v532 = vsub.f32 %v339, %v488
  %v533 = vsub.f32 %v340, %v491
  %v534 = vsub.f32 %v341, %v494
  %v535 = vsub.f32 %v342, %v497
  %v536 = vsub.f32 %v343, %v500
  %v537 = vsub.f32 %v344, %v503
  %v538 = vsub.f32 %v345, %v506
  %v539 = vsub.f32 %v474, %v509
  %v540 = vsub.f32 %v475, %v512
  %v541 = vsub.f32 %v476, %v515
  %v542 = vsub.f32 %v477, %v518
  %v543 = vsub.f32 %v478, %v521
  %v544 = vsub.f32 %v479, %v524
  %v545 = vsub.f32 %v480, %v527
  %v546 = vsub.f32 %v481, %v530
  %v547 = vmul.f32 %v531, 1.442695
  %v548 = vpow.pop %v547
  %v549 = vmul.f32 %v532, 1.442695
  %v550 = vpow.pop %v549
  %v551 = vmul.f32 %v533, 1.442695
  %v552 = vpow.pop %v551
  %v553 = vmul.f32 %v534, 1.442695
  %v554 = vpow.pop %v553
  %v555 = vmul.f32 %v535, 1.442695
  %v556 = vpow.pop %v555
  %v557 = vmul.f32 %v536, 1.442695
  %v558 = vpow.pop %v557
  %v559 = vmul.f32 %v537, 1.442695
  %v560 = vpow.pop %v559
  %v561 = vmul.f32 %v538, 1.442695
  %v562 = vpow.pop %v561
  %v563 = vmul.f32 %v539, 1.442695
  %v564 = vpow.pop %v563
  %v565 = vmul.f32 %v540, 1.442695
  %v566 = vpow.pop %v565
  %v567 = vmul.f32 %v541, 1.442695
  %v568 = vpow.pop %v567
  %v569 = vmul.f32 %v542, 1.442695
  %v570 = vpow.pop %v569
  %v571 = vmul.f32 %v543, 1.442695
  %v572 = vpow.pop %v571
  %v573 = vmul.f32 %v544, 1.442695
  %v574 = vpow.pop %v573
  %v575 = vmul.f32 %v545, 1.442695
  %v576 = vpow.pop %v575
  %v577 = vmul.f32 %v546, 1.442695
  %v578 = vpow.pop %v577
  %v579 = vsel %vm482, %v548, 0.0
  %580 = vadd.xlane.f32.xlu0 %v579
  %v581 = vpop.xlane.xlu0 %580
  %v582 = vsel %vm482, %v550, 0.0
  %583 = vadd.xlane.f32.xlu0 %v582
  %v584 = vpop.xlane.xlu0 %583
  %v585 = vsel %vm482, %v552, 0.0
  %586 = vadd.xlane.f32.xlu0 %v585
  %v587 = vpop.xlane.xlu0 %586
  %v588 = vsel %vm482, %v554, 0.0
  %589 = vadd.xlane.f32.xlu0 %v588
  %v590 = vpop.xlane.xlu0 %589
  %v591 = vsel %vm482, %v556, 0.0
  %592 = vadd.xlane.f32.xlu0 %v591
  %v593 = vpop.xlane.xlu0 %592
  %v594 = vsel %vm482, %v558, 0.0
  %595 = vadd.xlane.f32.xlu0 %v594
  %v596 = vpop.xlane.xlu0 %595
  %v597 = vsel %vm482, %v560, 0.0
  %598 = vadd.xlane.f32.xlu0 %v597
  %v599 = vpop.xlane.xlu0 %598
  %v600 = vsel %vm482, %v562, 0.0
  %601 = vadd.xlane.f32.xlu0 %v600
  %v602 = vpop.xlane.xlu0 %601
  %v603 = vsel %vm482, %v564, 0.0
  %604 = vadd.xlane.f32.xlu0 %v603
  %v605 = vpop.xlane.xlu0 %604
  %v606 = vsel %vm482, %v566, 0.0
  %607 = vadd.xlane.f32.xlu0 %v606
  %v608 = vpop.xlane.xlu0 %607
  %v609 = vsel %vm482, %v568, 0.0
  %610 = vadd.xlane.f32.xlu0 %v609
  %v611 = vpop.xlane.xlu0 %610
  %v612 = vsel %vm482, %v570, 0.0
  %613 = vadd.xlane.f32.xlu0 %v612
  %v614 = vpop.xlane.xlu0 %613
  %v615 = vsel %vm482, %v572, 0.0
  %616 = vadd.xlane.f32.xlu0 %v615
  %v617 = vpop.xlane.xlu0 %616
  %v618 = vsel %vm482, %v574, 0.0
  %619 = vadd.xlane.f32.xlu0 %v618
  %v620 = vpop.xlane.xlu0 %619
  %v621 = vsel %vm482, %v576, 0.0
  %622 = vadd.xlane.f32.xlu0 %v621
  %v623 = vpop.xlane.xlu0 %622
  %v624 = vsel %vm482, %v578, 0.0
  %625 = vadd.xlane.f32.xlu0 %v624
  %v626 = vpop.xlane.xlu0 %625
  %v627 = vrcp.pop %v581
  %v628 = vrcp.pop %v584
  %v629 = vrcp.pop %v587
  %v630 = vrcp.pop %v590
  %v631 = vrcp.pop %v593
  %v632 = vrcp.pop %v596
  %v633 = vrcp.pop %v599
  %v634 = vrcp.pop %v602
  %v635 = vrcp.pop %v605
  %v636 = vrcp.pop %v608
  %v637 = vrcp.pop %v611
  %v638 = vrcp.pop %v614
  %v639 = vrcp.pop %v617
  %v640 = vrcp.pop %v620
  %v641 = vrcp.pop %v623
  %v642 = vrcp.pop %v626
  %v643 = vmul.f32 %v548, %v627
  %v644 = vmul.f32 %v550, %v628
  %v645 = vmul.f32 %v552, %v629
  %v646 = vmul.f32 %v554, %v630
  %v647 = vmul.f32 %v556, %v631
  %v648 = vmul.f32 %v558, %v632
  %v649 = vmul.f32 %v560, %v633
  %v650 = vmul.f32 %v562, %v634
  %v651 = vmul.f32 %v564, %v635
  %v652 = vmul.f32 %v566, %v636
  %v653 = vmul.f32 %v568, %v637
  %v654 = vmul.f32 %v570, %v638
  %v655 = vmul.f32 %v572, %v639
  %v656 = vmul.f32 %v574, %v640
  %v657 = vmul.f32 %v576, %v641
  %v658 = vmul.f32 %v578, %v642
  %v659 = vcombine.low %v643, %v645
  %v660 = vcombine.high %v643, %v645
  %v662 = vunpack.c.l.s4 1983009808
  %v663 = vunpack.c.0.s8 %v662
  %v664 = vlaneseq
  %v665 = vshrl.u32 %v664, 7
  %v666 = vsub.s32 %v663, %v665
  %v667 = vrot.slane %v659, %v666
  %v669 = vunpack.c.l.s4 1983009808
  %v670 = vunpack.c.0.s8 %v669
  %v671 = vlaneseq
  %v672 = vshrl.u32 %v671, 7
  %v673 = vsub.s32 %v670, %v672
  %v674 = vrot.slane %v660, %v673
  %v675 = vcombine.low %v644, %v646
  %v676 = vcombine.high %v644, %v646
  %v678 = vunpack.c.l.s4 1983009808
  %v679 = vunpack.c.0.s8 %v678
  %v680 = vlaneseq
  %v681 = vshrl.u32 %v680, 7
  %v682 = vsub.s32 %v679, %v681
  %v683 = vrot.slane %v675, %v682
  %v685 = vunpack.c.l.s4 1983009808
  %v686 = vunpack.c.0.s8 %v685
  %v687 = vlaneseq
  %v688 = vshrl.u32 %v687, 7
  %v689 = vsub.s32 %v686, %v688
  %v690 = vrot.slane %v676, %v689
  %v691 = vcombine.low %v647, %v649
  %v692 = vcombine.high %v647, %v649
  %v694 = vunpack.c.l.s4 1983009808
  %v695 = vunpack.c.0.s8 %v694
  %v696 = vlaneseq
  %v697 = vshrl.u32 %v696, 7
  %v698 = vsub.s32 %v695, %v697
  %v699 = vrot.slane %v691, %v698
  %v701 = vunpack.c.l.s4 1983009808
  %v702 = vunpack.c.0.s8 %v701
  %v703 = vlaneseq
  %v704 = vshrl.u32 %v703, 7
  %v705 = vsub.s32 %v702, %v704
  %v706 = vrot.slane %v692, %v705
  %v707 = vcombine.low %v648, %v650
  %v708 = vcombine.high %v648, %v650
  %v710 = vunpack.c.l.s4 1983009808
  %v711 = vunpack.c.0.s8 %v710
  %v712 = vlaneseq
  %v713 = vshrl.u32 %v712, 7
  %v714 = vsub.s32 %v711, %v713
  %v715 = vrot.slane %v707, %v714
  %v717 = vunpack.c.l.s4 1983009808
  %v718 = vunpack.c.0.s8 %v717
  %v719 = vlaneseq
  %v720 = vshrl.u32 %v719, 7
  %v721 = vsub.s32 %v718, %v720
  %v722 = vrot.slane %v708, %v721
  %v723 = vcombine.low %v667, %v683
  %v724 = vcombine.high %v667, %v683
  %v726 = vunpack.c.l.s4 1934713408
  %v727 = vunpack.c.0.s8 %v726
  %v728 = vlaneseq
  %v729 = vshrl.u32 %v728, 7
  %v730 = vsub.s32 %v727, %v729
  %v731 = vrot.slane %v723, %v730
  %v733 = vunpack.c.l.s4 1934713408
  %v734 = vunpack.c.0.s8 %v733
  %v735 = vlaneseq
  %v736 = vshrl.u32 %v735, 7
  %v737 = vsub.s32 %v734, %v736
  %v738 = vrot.slane %v724, %v737
  %v739 = vcombine.low %v674, %v690
  %v740 = vcombine.high %v674, %v690
  %v742 = vunpack.c.l.s4 1934713408
  %v743 = vunpack.c.0.s8 %v742
  %v744 = vlaneseq
  %v745 = vshrl.u32 %v744, 7
  %v746 = vsub.s32 %v743, %v745
  %v747 = vrot.slane %v739, %v746
  %v749 = vunpack.c.l.s4 1934713408
  %v750 = vunpack.c.0.s8 %v749
  %v751 = vlaneseq
  %v752 = vshrl.u32 %v751, 7
  %v753 = vsub.s32 %v750, %v752
  %v754 = vrot.slane %v740, %v753
  %v755 = vcombine.low %v699, %v715
  %v756 = vcombine.high %v699, %v715
  %v758 = vunpack.c.l.s4 1934713408
  %v759 = vunpack.c.0.s8 %v758
  %v760 = vlaneseq
  %v761 = vshrl.u32 %v760, 7
  %v762 = vsub.s32 %v759, %v761
  %v763 = vrot.slane %v755, %v762
  %v765 = vunpack.c.l.s4 1934713408
  %v766 = vunpack.c.0.s8 %v765
  %v767 = vlaneseq
  %v768 = vshrl.u32 %v767, 7
  %v769 = vsub.s32 %v766, %v768
  %v770 = vrot.slane %v756, %v769
  %v771 = vcombine.low %v706, %v722
  %v772 = vcombine.high %v706, %v722
  %v774 = vunpack.c.l.s4 1934713408
  %v775 = vunpack.c.0.s8 %v774
  %v776 = vlaneseq
  %v777 = vshrl.u32 %v776, 7
  %v778 = vsub.s32 %v775, %v777
  %v779 = vrot.slane %v771, %v778
  %v781 = vunpack.c.l.s4 1934713408
  %v782 = vunpack.c.0.s8 %v781
  %v783 = vlaneseq
  %v784 = vshrl.u32 %v783, 7
  %v785 = vsub.s32 %v782, %v784
  %v786 = vrot.slane %v772, %v785
  %v787 = vcombine.low %v731, %v763
  %v788 = vcombine.high %v731, %v763
  %v789 = vcombine.low %v738, %v770
  %v790 = vcombine.high %v738, %v770
  %v791 = vcombine.low %v747, %v779
  %v792 = vcombine.high %v747, %v779
  %v793 = vcombine.low %v754, %v786
  %v794 = vcombine.high %v754, %v786
  %v795 = vcombine.low %v651, %v653
  %v796 = vcombine.high %v651, %v653
  %v798 = vunpack.c.l.s4 1983009808
  %v799 = vunpack.c.0.s8 %v798
  %v800 = vlaneseq
  %v801 = vshrl.u32 %v800, 7
  %v802 = vsub.s32 %v799, %v801
  %v803 = vrot.slane %v795, %v802
  %v805 = vunpack.c.l.s4 1983009808
  %v806 = vunpack.c.0.s8 %v805
  %v807 = vlaneseq
  %v808 = vshrl.u32 %v807, 7
  %v809 = vsub.s32 %v806, %v808
  %v810 = vrot.slane %v796, %v809
  %v811 = vcombine.low %v652, %v654
  %v812 = vcombine.high %v652, %v654
  %v814 = vunpack.c.l.s4 1983009808
  %v815 = vunpack.c.0.s8 %v814
  %v816 = vlaneseq
  %v817 = vshrl.u32 %v816, 7
  %v818 = vsub.s32 %v815, %v817
  %v819 = vrot.slane %v811, %v818
  %v821 = vunpack.c.l.s4 1983009808
  %v822 = vunpack.c.0.s8 %v821
  %v823 = vlaneseq
  %v824 = vshrl.u32 %v823, 7
  %v825 = vsub.s32 %v822, %v824
  %v826 = vrot.slane %v812, %v825
  %v827 = vcombine.low %v655, %v657
  %v828 = vcombine.high %v655, %v657
  %v830 = vunpack.c.l.s4 1983009808
  %v831 = vunpack.c.0.s8 %v830
  %v832 = vlaneseq
  %v833 = vshrl.u32 %v832, 7
  %v834 = vsub.s32 %v831, %v833
  %v835 = vrot.slane %v827, %v834
  %v837 = vunpack.c.l.s4 1983009808
  %v838 = vunpack.c.0.s8 %v837
  %v839 = vlaneseq
  %v840 = vshrl.u32 %v839, 7
  %v841 = vsub.s32 %v838, %v840
  %v842 = vrot.slane %v828, %v841
  %v843 = vcombine.low %v656, %v658
  %v844 = vcombine.high %v656, %v658
  %v846 = vunpack.c.l.s4 1983009808
  %v847 = vunpack.c.0.s8 %v846
  %v848 = vlaneseq
  %v849 = vshrl.u32 %v848, 7
  %v850 = vsub.s32 %v847, %v849
  %v851 = vrot.slane %v843, %v850
  %v853 = vunpack.c.l.s4 1983009808
  %v854 = vunpack.c.0.s8 %v853
  %v855 = vlaneseq
  %v856 = vshrl.u32 %v855, 7
  %v857 = vsub.s32 %v854, %v856
  %v858 = vrot.slane %v844, %v857
  %v859 = vcombine.low %v803, %v819
  %v860 = vcombine.high %v803, %v819
  %v862 = vunpack.c.l.s4 1934713408
  %v863 = vunpack.c.0.s8 %v862
  %v864 = vlaneseq
  %v865 = vshrl.u32 %v864, 7
  %v866 = vsub.s32 %v863, %v865
  %v867 = vrot.slane %v859, %v866
  %v869 = vunpack.c.l.s4 1934713408
  %v870 = vunpack.c.0.s8 %v869
  %v871 = vlaneseq
  %v872 = vshrl.u32 %v871, 7
  %v873 = vsub.s32 %v870, %v872
  %v874 = vrot.slane %v860, %v873
  %v875 = vcombine.low %v810, %v826
  %v876 = vcombine.high %v810, %v826
  %v878 = vunpack.c.l.s4 1934713408
  %v879 = vunpack.c.0.s8 %v878
  %v880 = vlaneseq
  %v881 = vshrl.u32 %v880, 7
  %v882 = vsub.s32 %v879, %v881
  %v883 = vrot.slane %v875, %v882
  %v885 = vunpack.c.l.s4 1934713408
  %v886 = vunpack.c.0.s8 %v885
  %v887 = vlaneseq
  %v888 = vshrl.u32 %v887, 7
  %v889 = vsub.s32 %v886, %v888
  %v890 = vrot.slane %v876, %v889
  %v891 = vcombine.low %v835, %v851
  %v892 = vcombine.high %v835, %v851
  %v894 = vunpack.c.l.s4 1934713408
  %v895 = vunpack.c.0.s8 %v894
  %v896 = vlaneseq
  %v897 = vshrl.u32 %v896, 7
  %v898 = vsub.s32 %v895, %v897
  %v899 = vrot.slane %v891, %v898
  %v901 = vunpack.c.l.s4 1934713408
  %v902 = vunpack.c.0.s8 %v901
  %v903 = vlaneseq
  %v904 = vshrl.u32 %v903, 7
  %v905 = vsub.s32 %v902, %v904
  %v906 = vrot.slane %v892, %v905
  %v907 = vcombine.low %v842, %v858
  %v908 = vcombine.high %v842, %v858
  %v910 = vunpack.c.l.s4 1934713408
  %v911 = vunpack.c.0.s8 %v910
  %v912 = vlaneseq
  %v913 = vshrl.u32 %v912, 7
  %v914 = vsub.s32 %v911, %v913
  %v915 = vrot.slane %v907, %v914
  %v917 = vunpack.c.l.s4 1934713408
  %v918 = vunpack.c.0.s8 %v917
  %v919 = vlaneseq
  %v920 = vshrl.u32 %v919, 7
  %v921 = vsub.s32 %v918, %v920
  %v922 = vrot.slane %v908, %v921
  %v923 = vcombine.low %v867, %v899
  %v924 = vcombine.high %v867, %v899
  %v925 = vcombine.low %v874, %v906
  %v926 = vcombine.high %v874, %v906
  %v927 = vcombine.low %v883, %v915
  %v928 = vcombine.high %v883, %v915
  %v929 = vcombine.low %v890, %v922
  %v930 = vcombine.high %v890, %v922
  %933 = vrot.lane.b32.xlu0 %v788, 32
  %v934 = vpop.permute.xlu0 %933
  %935 = vrot.lane.b32.xlu0 %v924, 32
  %v936 = vpop.permute.xlu0 %935
  %941 = vrot.lane.b32.xlu0 %v789, 64
  %v942 = vpop.permute.xlu0 %941
  %943 = vrot.lane.b32.xlu0 %v925, 64
  %v944 = vpop.permute.xlu0 %943
  %949 = vrot.lane.b32.xlu0 %v790, 96
  %v950 = vpop.permute.xlu0 %949
  %951 = vrot.lane.b32.xlu0 %v926, 96
  %v952 = vpop.permute.xlu0 %951
  %957 = vrot.lane.b32.xlu0 %v792, 32
  %v958 = vpop.permute.xlu0 %957
  %959 = vrot.lane.b32.xlu0 %v928, 32
  %v960 = vpop.permute.xlu0 %959
  %965 = vrot.lane.b32.xlu0 %v793, 64
  %v966 = vpop.permute.xlu0 %965
  %967 = vrot.lane.b32.xlu0 %v929, 64
  %v968 = vpop.permute.xlu0 %967
  %973 = vrot.lane.b32.xlu0 %v794, 96
  %v974 = vpop.permute.xlu0 %973
  %975 = vrot.lane.b32.xlu0 %v930, 96
  %v976 = vpop.permute.xlu0 %975
  %v979 = vsel %vm482, %v787, %v934
  %v980 = vsel %vm482, %v923, %v936
  %vm981 = vcmask 523264
  %v982 = vsel %vm981, %v979, %v942
  %v983 = vsel %vm981, %v980, %v944
  %vm984 = vcmask 785408
  %v985 = vsel %vm984, %v982, %v950
  %v986 = vsel %vm984, %v983, %v952
  %v987 = vsel %vm482, %v791, %v958
  %v988 = vsel %vm482, %v927, %v960
  %v989 = vsel %vm981, %v987, %v966
  %v990 = vsel %vm981, %v988, %v968
  %v991 = vsel %vm984, %v989, %v974
  %v992 = vsel %vm984, %v990, %v976
  %v993 = vld [vmem:[%s2] sm:$0xff]
  %v994 = vld [vmem:[%s2 + $0x8] sm:$0xff]
  %v995 = vld [vmem:[%s2 + $0x10] sm:$0xff]
  %v996 = vld [vmem:[%s2 + $0x18] sm:$0xff]
  %v997 = vld [vmem:[%s2 + $0x20] sm:$0xff]
  %v998 = vld [vmem:[%s2 + $0x28] sm:$0xff]
  %v999 = vld [vmem:[%s2 + $0x30] sm:$0xff]
  %v1000 = vld [vmem:[%s2 + $0x38] sm:$0xff]
  %v1001 = vld [vmem:[%s2 + $0x40] sm:$0xff]
  %v1002 = vld [vmem:[%s2 + $0x48] sm:$0xff]
  %v1003 = vld [vmem:[%s2 + $0x50] sm:$0xff]
  %v1004 = vld [vmem:[%s2 + $0x58] sm:$0xff]
  %v1005 = vld [vmem:[%s2 + $0x60] sm:$0xff]
  %v1006 = vld [vmem:[%s2 + $0x68] sm:$0xff]
  %v1007 = vld [vmem:[%s2 + $0x70] sm:$0xff]
  %v1008 = vld [vmem:[%s2 + $0x78] sm:$0xff]
  %v1009 = vld [vmem:[%s2 + $0x80] sm:$0xff]
  %v1010 = vld [vmem:[%s2 + $0x88] sm:$0xff]
  %v1011 = vld [vmem:[%s2 + $0x90] sm:$0xff]
  %v1012 = vld [vmem:[%s2 + $0x98] sm:$0xff]
  %v1013 = vld [vmem:[%s2 + $0xa0] sm:$0xff]
  %v1014 = vld [vmem:[%s2 + $0xa8] sm:$0xff]
  %v1015 = vld [vmem:[%s2 + $0xb0] sm:$0xff]
  %v1016 = vld [vmem:[%s2 + $0xb8] sm:$0xff]
  %v1017 = vld [vmem:[%s2 + $0xc0] sm:$0xff]
  %v1018 = vld [vmem:[%s2 + $0xc8] sm:$0xff]
  %v1019 = vld [vmem:[%s2 + $0xd0] sm:$0xff]
  %v1020 = vld [vmem:[%s2 + $0xd8] sm:$0xff]
  %v1021 = vld [vmem:[%s2 + $0xe0] sm:$0xff]
  %v1022 = vld [vmem:[%s2 + $0xe8] sm:$0xff]
  %v1023 = vld [vmem:[%s2 + $0xf0] sm:$0xff]
  %v1024 = vld [vmem:[%s2 + $0xf8] sm:$0xff]
  %1025 = vmatprep.subr.mxu0 0.0
  %1026 = vmatpush1.msra.mxu0 %v993
  %1027 = vmatprep.subr.mxu0 0.0
  %1028 = vmatpush1.msra.mxu0 %v994
  %1029 = vmatprep.subr.mxu0 0.0
  %1030 = vmatpush1.msra.mxu0 %v995
  %1031 = vmatprep.subr.mxu0 0.0
  %1032 = vmatpush1.msra.mxu0 %v996
  %1033 = vmatprep.subr.mxu0 0.0
  %1034 = vmatpush1.msra.mxu0 %v997
  %1035 = vmatprep.subr.mxu0 0.0
  %1036 = vmatpush1.msra.mxu0 %v998
  %1037 = vmatprep.subr.mxu0 0.0
  %1038 = vmatpush1.msra.mxu0 %v999
  %1039 = vmatprep.subr.mxu0 0.0
  %1040 = vmatpush1.msra.mxu0 %v1000
  %1041 = vmatprep.subr.mxu0 0.0
  %1042 = vmatpush1.msra.mxu0 %v1001
  %1043 = vmatprep.subr.mxu0 0.0
  %1044 = vmatpush1.msra.mxu0 %v1002
  %1045 = vmatprep.subr.mxu0 0.0
  %1046 = vmatpush1.msra.mxu0 %v1003
  %1047 = vmatprep.subr.mxu0 0.0
  %1048 = vmatpush1.msra.mxu0 %v1004
  %1049 = vmatprep.subr.mxu0 0.0
  %1050 = vmatpush1.msra.mxu0 %v1005
  %1051 = vmatprep.subr.mxu0 0.0
  %1052 = vmatpush1.msra.mxu0 %v1006
  %1053 = vmatprep.subr.mxu0 0.0
  %1054 = vmatpush1.msra.mxu0 %v1007
  %1055 = vmatprep.subr.mxu0 0.0
  %1056 = vmatpush1.msra.mxu0 %v1008
  %1057 = vmatprep.subr.mxu0 0.0
  %1058 = vmatpush1.msra.mxu0 %v1009
  %1059 = vmatprep.subr.mxu0 0.0
  %1060 = vmatpush1.msra.mxu0 %v1010
  %1061 = vmatprep.subr.mxu0 0.0
  %1062 = vmatpush1.msra.mxu0 %v1011
  %1063 = vmatprep.subr.mxu0 0.0
  %1064 = vmatpush1.msra.mxu0 %v1012
  %1065 = vmatprep.subr.mxu0 0.0
  %1066 = vmatpush1.msra.mxu0 %v1013
  %1067 = vmatprep.subr.mxu0 0.0
  %1068 = vmatpush1.msra.mxu0 %v1014
  %1069 = vmatprep.subr.mxu0 0.0
  %1070 = vmatpush1.msra.mxu0 %v1015
  %1071 = vmatprep.subr.mxu0 0.0
  %1072 = vmatpush1.msra.mxu0 %v1016
  %1073 = vmatprep.subr.mxu0 0.0
  %1074 = vmatpush1.msra.mxu0 %v1017
  %1075 = vmatprep.subr.mxu0 0.0
  %1076 = vmatpush1.msra.mxu0 %v1018
  %1077 = vmatprep.subr.mxu0 0.0
  %1078 = vmatpush1.msra.mxu0 %v1019
  %1079 = vmatprep.subr.mxu0 0.0
  %1080 = vmatpush1.msra.mxu0 %v1020
  %1081 = vmatprep.subr.mxu0 0.0
  %1082 = vmatpush1.msra.mxu0 %v1021
  %1083 = vmatprep.subr.mxu0 0.0
  %1084 = vmatpush1.msra.mxu0 %v1022
  %1085 = vmatprep.subr.mxu0 0.0
  %1086 = vmatpush1.msra.mxu0 %v1023
  %1087 = vmatprep.subr.mxu0 0.0
  %1088 = vmatpush1.msra.mxu0 %v1024
  %1089 = vmatprep.mubr.f32.mxu0 %v991
  %1090 = vmatmul.mubr.f32.gmra.mrb[0].mxu0 %v985
  %v1091 = vpop.f32.mrb[0].mxu0
  %v1092 = vadd.f32 0.0, %v1091
  %v1093 = vpop.f32.mrb[0].mxu0
  %1094 = vmatprep.mubr.f32.mxu0 %v992
  %1095 = vmatmul.mubr.f32.gmra.mrb[0].mxu0 %v986
  %v1096 = vpop.f32.mrb[0].mxu0
  %v1097 = vadd.f32 0.0, %v1096
  %v1098 = vpop.f32.mrb[0].mxu0
  %1099 = vdwg.mxu0
  %1100 = vst [vmem:[%s4] sm:$0xff] %v1092
  %1101 = vst [vmem:[%s4 + $0x8] sm:$0xff] %v1097
  // Predicated region
  $region18: #{sdpa_pallas.1} parent=0 // pred_check
    _
  $region19: #{sdpa_pallas.1} parent=0 // pred_check_branch
    %1103 = sbr.rel (0) target = $region21
  $region20: #{sdpa_pallas.1} parent=0 // pred_region
    _
  $region21: #{sdpa_pallas.1} parent=0 // pred_fallthru
    _
  // Predicated region
  $region22: #{sdpa_pallas.1} parent=0 // pred_check
    _
  $region23: #{sdpa_pallas.1} parent=0 // pred_check_branch
    %1105 = sbr.rel (0) target = $region25
  $region24: #{sdpa_pallas.1} parent=0 // pred_region
    _
  $region25: #{sdpa_pallas.1} parent=0 // pred_fallthru
    _

</llo_original>
